<compile_context>
chip_gen: v6e
topology: v6e:2x2x1
jax: 0.10.0
libtpu: 0.0.40
codegen_flags: <defaults>
</compile_context>

<pallas_src>
import functools

import jax
import jax.numpy as jnp
from jax.experimental import pallas as pl
from jax.experimental.pallas import tpu as pltpu


def _round_up(x, m):
    return (x + m - 1) // m * m


# --------------------------------------------------------------------------- kernel
def _layered_blend_kernel(colors_ref, dists_ref, out_ref, *,
                          K, C, sigma, inv_sigma, background, clip_inside):
    """Front-to-back layered alpha compositing for one pixel tile.

    colors_ref: (K*C, TP)  f32/bf16   row C*k+c = channel c of face layer k
    dists_ref : (K,   TP)  f32        +inf where pix_to_face < 0 (mask pre-folded)
    out_ref   : (C+1, TP)  f32        rows 0..C-1 = RGB, row C = alpha
    """
    tp = out_ref.shape[-1]
    occ = jnp.ones((1, tp), jnp.float32)      # prod_{j<k} (1 - alpha_j)
    acc = jnp.zeros((C, tp), jnp.float32)     # composited foreground colour

    # K is small & static -> fully unrolled; per-k loads keep live vregs low so the
    # pixel tile can be grown without spilling.
    for k in range(K):
        d_k = dists_ref[k:k + 1, :]                               # (1, TP)
        if sigma == 0.0:
            a_k = (d_k <= 0.0).astype(jnp.float32)
        elif clip_inside:
            a_k = jnp.exp(-jnp.maximum(d_k, 0.0) * inv_sigma)     # +inf -> alpha 0
        else:
            a_k = jax.nn.sigmoid(-d_k * inv_sigma)                # +inf -> alpha 0
        w_k = occ * a_k                                           # (1, TP)
        col_k = colors_ref[C * k:C * (k + 1), :].astype(jnp.float32)  # (C, TP)
        acc = acc + w_k * col_k
        occ = occ * (1.0 - a_k)

    # background layer (alpha=1) + output alpha; background as scalar constants.
    rows = [acc[c:c + 1, :] + occ * float(background[c]) for c in range(C)]
    rows.append(1.0 - occ)
    out_ref[...] = jnp.concatenate(rows, axis=0)                  # (C+1, TP)


# --------------------------------------------------------------------- pallas wrapper
def layered_rgb_blend_pallas(colors_kcp, dists_kp, *, num_channels, sigma=1e-4,
                             background=(1.0, 1.0, 1.0), clip_inside=True,
                             tile_pixels=512):
    """Pixel-on-lane layered RGB blend.

    colors_kcp: (N, K*C, P) float32 or bfloat16
    dists_kp  : (N, K,   P) float32, +inf where the fragment slot is empty
    returns   : (N, C+1, P) float32
    """
    N, KC, P = colors_kcp.shape
    C = int(num_channels)
    K = KC // C
    assert K * C == KC and dists_kp.shape == (N, K, P)

    if C != 3:                                # mirror torch layered_rgb_blend
        background = (1.0,) * C
    background = tuple(float(b) for b in background)
    if dists_kp.dtype != jnp.float32:
        dists_kp = dists_kp.astype(jnp.float32)

    # pixel tile: multiple of 128, no bigger than (rounded) P
    tile = _round_up(min(int(tile_pixels), _round_up(P, 128)), 128)
    P_pad = _round_up(P, tile)
    if P_pad != P:                            # padded pixels render pure background
        colors_kcp = jnp.pad(colors_kcp, ((0, 0), (0, 0), (0, P_pad - P)))
        dists_kp = jnp.pad(dists_kp, ((0, 0), (0, 0), (0, P_pad - P)),
                           constant_values=jnp.inf)

    kernel = functools.partial(
        _layered_blend_kernel, K=K, C=C, sigma=float(sigma),
        inv_sigma=0.0 if sigma == 0.0 else 1.0 / float(sigma),
        background=background, clip_inside=bool(clip_inside))

    out = pl.pallas_call(
        kernel,
        out_shape=jax.ShapeDtypeStruct((N, C + 1, P_pad), jnp.float32),
        grid=(N, P_pad // tile),
        in_specs=[
            pl.BlockSpec((None, KC, tile), lambda n, i: (n, 0, i)),   # colors
            pl.BlockSpec((None, K, tile), lambda n, i: (n, 0, i)),    # masked dists
        ],
        out_specs=pl.BlockSpec((None, C + 1, tile), lambda n, i: (n, 0, i)),
        compiler_params=pltpu.CompilerParams(
            dimension_semantics=("parallel", "parallel")),
    )(colors_kcp, dists_kp)

    return out[..., :P] if P_pad != P else out


def fragments_to_kernel_layout(texels, pix_to_face, dists):
    """pytorch3d-style (N,H,W,K,C)/(N,H,W,K) -> pixel-on-lane kernel layout.

    TODO(synk): in a real pipeline the rasterizer / texture-sampling step (no Pallas
    equivalent) should emit these layouts directly so this single fused
    mask-fold + transpose pass over HBM disappears entirely.
    """
    N, H, W, K, C = texels.shape
    P = H * W
    colors_kcp = jnp.transpose(texels.reshape(N, P, K * C), (0, 2, 1))       # (N,K*C,P)
    dists_masked = jnp.where(pix_to_face >= 0, dists.astype(jnp.float32), jnp.inf)
    dists_kp = jnp.transpose(dists_masked.reshape(N, P, K), (0, 2, 1))       # (N,K,P)
    return colors_kcp, dists_kp


# ------------------------------------------------------------------------- module API
class RendererPallas:
    """Mirrors Renderer(img_size, ...) default path: raw LayeredShader + layered_rgb_blend."""

    def __init__(self, img_size, sigma=1e-4, background_color=(1.0, 1.0, 1.0),
                 faces_per_pixel=8, clip_inside=True, ambient_color=(1.0, 1.0, 1.0),
                 colors_in_bf16=False, tile_pixels=512):
        self.img_size = (img_size, img_size) if isinstance(img_size, int) else tuple(img_size)
        self.sigma = float(sigma)
        self.background_color = tuple(background_color)
        self.faces_per_pixel = faces_per_pixel
        self.clip_inside = bool(clip_inside)
        self.colors_in_bf16 = bool(colors_in_bf16)
        self.tile_pixels = int(tile_pixels)
        # AmbientLights default ambient_color == (1,1,1); decide statically (no device sync).
        self.ambient_color = tuple(float(a) for a in ambient_color)
        self._apply_ambient = any(a != 1.0 for a in self.ambient_color)

    def __call__(self, texels, pix_to_face, dists):
        """texels (N,H,W,K,C), pix_to_face (N,H,W,K) int, dists (N,H,W,K) -> (N,C+1,H,W)."""
        N, H, W, K, C = texels.shape
        colors = texels
        if self._apply_ambient:                      # shading_type == 'raw'
            colors = colors * jnp.asarray(self.ambient_color, colors.dtype)
        colors_kcp, dists_kp = fragments_to_kernel_layout(colors, pix_to_face, dists)
        if self.colors_in_bf16:                      # optional HBM-bandwidth mode
            colors_kcp = colors_kcp.astype(jnp.bfloat16)
        out = layered_rgb_blend_pallas(
            colors_kcp, dists_kp, num_channels=C, sigma=self.sigma,
            background=self.background_color, clip_inside=self.clip_inside,
            tile_pixels=self.tile_pixels)
        return out.reshape(N, C + 1, H, W)           # free reshape, no transpose


# ---------------------------------------------------------------------- JAX reference
def _layered_rgb_blend_ref(colors, pix_to_face, dists, sigma, background, clip_inside=True):
    """Pure-JAX mirror of the torch layered_rgb_blend semantics (for validation)."""
    N, H, W, K, C = colors.shape
    mask = (pix_to_face >= 0).astype(jnp.float32)
    if sigma == 0:
        alpha = (dists <= 0).astype(jnp.float32) * mask
    elif clip_inside:
        alpha = jnp.exp(-jnp.clip(dists, 0.0) / sigma) * mask
    else:
        alpha = jax.nn.sigmoid(-dists / sigma) * mask
    occ = jnp.cumprod(1.0 - alpha, axis=-1)
    occ = jnp.concatenate([jnp.ones((N, H, W, 1), jnp.float32), occ], axis=-1)
    bg = jnp.asarray(background if C == 3 else (1.0,) * C, jnp.float32)
    colors_b = jnp.concatenate([colors, jnp.broadcast_to(bg, (N, H, W, 1, C))], axis=-2)
    alpha_b = jnp.concatenate([alpha, jnp.ones((N, H, W, 1), jnp.float32)], axis=-1)
    rgb = (occ[..., None] * alpha_b[..., None] * colors_b).sum(-2)
    a = 1.0 - occ[..., -1]
    return jnp.transpose(jnp.concatenate([rgb, a[..., None]], axis=-1), (0, 3, 1, 2))


if __name__ == "__main__":
    # small synthetic fragments: N=2, H=W=16, K=8 faces per pixel, C=3 channels
    N, H, W, K, C = 2, 16, 16, 8, 3
    key = jax.random.PRNGKey(0)
    k1, k2, k3, k4 = jax.random.split(key, 4)

    texels = jax.random.uniform(k1, (N, H, W, K, C), dtype=jnp.float32)
    face_ids = jax.random.randint(k2, (N, H, W, K), 0, 100, dtype=jnp.int32)
    empty = jax.random.uniform(k3, (N, H, W, K)) < 0.3          # ~30% empty fragments
    pix_to_face = jnp.where(empty, jnp.int32(-1), face_ids)
    dists = jax.random.normal(k4, (N, H, W, K), dtype=jnp.float32) * 1e-4

    renderer = RendererPallas(img_size=H, sigma=1e-4,
                              background_color=(1.0, 1.0, 1.0),
                              faces_per_pixel=K, clip_inside=True)

    out = jax.block_until_ready(renderer(texels, pix_to_face, dists))
    assert out.shape == (N, C + 1, H, W), out.shape

    ref = _layered_rgb_blend_ref(texels, pix_to_face, dists,
                                 sigma=1e-4, background=(1.0, 1.0, 1.0))
    err = float(jnp.max(jnp.abs(out - ref)))
    assert err < 1e-5, err

    # bfloat16-colour bandwidth mode (looser tolerance, same semantics)
    out_bf16 = jax.block_until_ready(
        RendererPallas(H, sigma=1e-4, colors_in_bf16=True)(texels, pix_to_face, dists))
    assert float(jnp.max(jnp.abs(out_bf16 - ref))) < 2e-2

    # NaN garbage in empty fragments (pix_to_face == -1) must not leak into the image
    dists_nan = jnp.where(pix_to_face < 0, jnp.nan, dists)
    out_nan = jax.block_until_ready(renderer(texels, pix_to_face, dists_nan))
    assert bool(jnp.all(jnp.isfinite(out_nan)))
    assert float(jnp.max(jnp.abs(out_nan - ref))) < 1e-5

    print("KERNEL_OK")
</pallas_src>

<mosaic_0001>
module attributes {stable_mosaic.version = 11 : i64} {
  func.func @_layered_blend_kernel(%arg0: i32, %arg1: i32, %arg2: memref<1x24x256xf32, #tpu.memory_space<vmem>>, %arg3: memref<1x8x256xf32, #tpu.memory_space<vmem>>, %arg4: memref<1x4x256xf32, #tpu.memory_space<vmem>>) attributes {dimension_semantics = [#tpu.dimension_semantics<parallel>, #tpu.dimension_semantics<parallel>], iteration_bounds = array<i64: 2, 1>, scalar_prefetch = 0 : i64, scratch_operands = 0 : i64, tpu.core_type = #tpu.core_type<tc>, window_params = [{transform_indices = @transform_0, window_bounds = array<i64: 1, 24, 256>}, {transform_indices = @transform_1, window_bounds = array<i64: 1, 8, 256>}, {transform_indices = @transform_2, window_bounds = array<i64: 1, 4, 256>}]} {
    %cst = arith.constant 1.000000e+00 : f32
    %0 = vector.broadcast %cst : f32 to vector<1x256xf32>
    %cst_0 = arith.constant 0.000000e+00 : f32
    %1 = vector.broadcast %cst_0 : f32 to vector<3x256xf32>
    %c0 = arith.constant 0 : index
    %c0_1 = arith.constant 0 : index
    %c0_2 = arith.constant 0 : index
    %2 = vector.load %arg3[%c0, %c0_1, %c0_2] : memref<1x8x256xf32, #tpu.memory_space<vmem>>, vector<1x1x256xf32>
    %3 = vector.shape_cast %2 : vector<1x1x256xf32> to vector<1x256xf32>
    %cst_3 = arith.constant 0.000000e+00 : f32
    %4 = vector.broadcast %cst_3 : f32 to vector<1x256xf32>
    %5 = arith.maximumf %3, %4 : vector<1x256xf32>
    %cst_4 = arith.constant 0.000000e+00 : f32
    %6 = vector.broadcast %cst_4 : f32 to vector<1x256xf32>
    %7 = arith.subf %6, %5 : vector<1x256xf32>
    %cst_5 = arith.constant 1.000000e+04 : f32
    %8 = vector.broadcast %cst_5 : f32 to vector<1x256xf32>
    %9 = arith.mulf %7, %8 : vector<1x256xf32>
    %10 = math.exp %9 : vector<1x256xf32>
    %11 = arith.mulf %0, %10 : vector<1x256xf32>
    %c0_6 = arith.constant 0 : index
    %c0_7 = arith.constant 0 : index
    %c0_8 = arith.constant 0 : index
    %12 = vector.load %arg2[%c0_6, %c0_7, %c0_8] : memref<1x24x256xf32, #tpu.memory_space<vmem>>, vector<1x3x256xf32>
    %13 = vector.shape_cast %12 : vector<1x3x256xf32> to vector<3x256xf32>
    %14 = vector.broadcast %11 : vector<1x256xf32> to vector<3x256xf32>
    %15 = arith.mulf %14, %13 : vector<3x256xf32>
    %16 = arith.addf %1, %15 : vector<3x256xf32>
    %cst_9 = arith.constant 1.000000e+00 : f32
    %17 = vector.broadcast %cst_9 : f32 to vector<1x256xf32>
    %18 = arith.subf %17, %10 : vector<1x256xf32>
    %19 = arith.mulf %0, %18 : vector<1x256xf32>
    %c0_10 = arith.constant 0 : index
    %c1 = arith.constant 1 : index
    %c0_11 = arith.constant 0 : index
    %20 = vector.load %arg3[%c0_10, %c1, %c0_11] : memref<1x8x256xf32, #tpu.memory_space<vmem>>, vector<1x1x256xf32>
    %21 = vector.shape_cast %20 : vector<1x1x256xf32> to vector<1x256xf32>
    %cst_12 = arith.constant 0.000000e+00 : f32
    %22 = vector.broadcast %cst_12 : f32 to vector<1x256xf32>
    %23 = arith.maximumf %21, %22 : vector<1x256xf32>
    %cst_13 = arith.constant 0.000000e+00 : f32
    %24 = vector.broadcast %cst_13 : f32 to vector<1x256xf32>
    %25 = arith.subf %24, %23 : vector<1x256xf32>
    %cst_14 = arith.constant 1.000000e+04 : f32
    %26 = vector.broadcast %cst_14 : f32 to vector<1x256xf32>
    %27 = arith.mulf %25, %26 : vector<1x256xf32>
    %28 = math.exp %27 : vector<1x256xf32>
    %29 = arith.mulf %19, %28 : vector<1x256xf32>
    %c0_15 = arith.constant 0 : index
    %c3 = arith.constant 3 : index
    %c0_16 = arith.constant 0 : index
    %30 = vector.load %arg2[%c0_15, %c3, %c0_16] : memref<1x24x256xf32, #tpu.memory_space<vmem>>, vector<1x3x256xf32>
    %31 = vector.shape_cast %30 : vector<1x3x256xf32> to vector<3x256xf32>
    %32 = vector.broadcast %29 : vector<1x256xf32> to vector<3x256xf32>
    %33 = arith.mulf %32, %31 : vector<3x256xf32>
    %34 = arith.addf %16, %33 : vector<3x256xf32>
    %cst_17 = arith.constant 1.000000e+00 : f32
    %35 = vector.broadcast %cst_17 : f32 to vector<1x256xf32>
    %36 = arith.subf %35, %28 : vector<1x256xf32>
    %37 = arith.mulf %19, %36 : vector<1x256xf32>
    %c0_18 = arith.constant 0 : index
    %c2 = arith.constant 2 : index
    %c0_19 = arith.constant 0 : index
    %38 = vector.load %arg3[%c0_18, %c2, %c0_19] : memref<1x8x256xf32, #tpu.memory_space<vmem>>, vector<1x1x256xf32>
    %39 = vector.shape_cast %38 : vector<1x1x256xf32> to vector<1x256xf32>
    %cst_20 = arith.constant 0.000000e+00 : f32
    %40 = vector.broadcast %cst_20 : f32 to vector<1x256xf32>
    %41 = arith.maximumf %39, %40 : vector<1x256xf32>
    %cst_21 = arith.constant 0.000000e+00 : f32
    %42 = vector.broadcast %cst_21 : f32 to vector<1x256xf32>
    %43 = arith.subf %42, %41 : vector<1x256xf32>
    %cst_22 = arith.constant 1.000000e+04 : f32
    %44 = vector.broadcast %cst_22 : f32 to vector<1x256xf32>
    %45 = arith.mulf %43, %44 : vector<1x256xf32>
    %46 = math.exp %45 : vector<1x256xf32>
    %47 = arith.mulf %37, %46 : vector<1x256xf32>
    %c0_23 = arith.constant 0 : index
    %c6 = arith.constant 6 : index
    %c0_24 = arith.constant 0 : index
    %48 = vector.load %arg2[%c0_23, %c6, %c0_24] : memref<1x24x256xf32, #tpu.memory_space<vmem>>, vector<1x3x256xf32>
    %49 = vector.shape_cast %48 : vector<1x3x256xf32> to vector<3x256xf32>
    %50 = vector.broadcast %47 : vector<1x256xf32> to vector<3x256xf32>
    %51 = arith.mulf %50, %49 : vector<3x256xf32>
    %52 = arith.addf %34, %51 : vector<3x256xf32>
    %cst_25 = arith.constant 1.000000e+00 : f32
    %53 = vector.broadcast %cst_25 : f32 to vector<1x256xf32>
    %54 = arith.subf %53, %46 : vector<1x256xf32>
    %55 = arith.mulf %37, %54 : vector<1x256xf32>
    %c0_26 = arith.constant 0 : index
    %c3_27 = arith.constant 3 : index
    %c0_28 = arith.constant 0 : index
    %56 = vector.load %arg3[%c0_26, %c3_27, %c0_28] : memref<1x8x256xf32, #tpu.memory_space<vmem>>, vector<1x1x256xf32>
    %57 = vector.shape_cast %56 : vector<1x1x256xf32> to vector<1x256xf32>
    %cst_29 = arith.constant 0.000000e+00 : f32
    %58 = vector.broadcast %cst_29 : f32 to vector<1x256xf32>
    %59 = arith.maximumf %57, %58 : vector<1x256xf32>
    %cst_30 = arith.constant 0.000000e+00 : f32
    %60 = vector.broadcast %cst_30 : f32 to vector<1x256xf32>
    %61 = arith.subf %60, %59 : vector<1x256xf32>
    %cst_31 = arith.constant 1.000000e+04 : f32
    %62 = vector.broadcast %cst_31 : f32 to vector<1x256xf32>
    %63 = arith.mulf %61, %62 : vector<1x256xf32>
    %64 = math.exp %63 : vector<1x256xf32>
    %65 = arith.mulf %55, %64 : vector<1x256xf32>
    %c0_32 = arith.constant 0 : index
    %c9 = arith.constant 9 : index
    %c0_33 = arith.constant 0 : index
    %66 = vector.load %arg2[%c0_32, %c9, %c0_33] : memref<1x24x256xf32, #tpu.memory_space<vmem>>, vector<1x3x256xf32>
    %67 = vector.shape_cast %66 : vector<1x3x256xf32> to vector<3x256xf32>
    %68 = vector.broadcast %65 : vector<1x256xf32> to vector<3x256xf32>
    %69 = arith.mulf %68, %67 : vector<3x256xf32>
    %70 = arith.addf %52, %69 : vector<3x256xf32>
    %cst_34 = arith.constant 1.000000e+00 : f32
    %71 = vector.broadcast %cst_34 : f32 to vector<1x256xf32>
    %72 = arith.subf %71, %64 : vector<1x256xf32>
    %73 = arith.mulf %55, %72 : vector<1x256xf32>
    %c0_35 = arith.constant 0 : index
    %c4 = arith.constant 4 : index
    %c0_36 = arith.constant 0 : index
    %74 = vector.load %arg3[%c0_35, %c4, %c0_36] : memref<1x8x256xf32, #tpu.memory_space<vmem>>, vector<1x1x256xf32>
    %75 = vector.shape_cast %74 : vector<1x1x256xf32> to vector<1x256xf32>
    %cst_37 = arith.constant 0.000000e+00 : f32
    %76 = vector.broadcast %cst_37 : f32 to vector<1x256xf32>
    %77 = arith.maximumf %75, %76 : vector<1x256xf32>
    %cst_38 = arith.constant 0.000000e+00 : f32
    %78 = vector.broadcast %cst_38 : f32 to vector<1x256xf32>
    %79 = arith.subf %78, %77 : vector<1x256xf32>
    %cst_39 = arith.constant 1.000000e+04 : f32
    %80 = vector.broadcast %cst_39 : f32 to vector<1x256xf32>
    %81 = arith.mulf %79, %80 : vector<1x256xf32>
    %82 = math.exp %81 : vector<1x256xf32>
    %83 = arith.mulf %73, %82 : vector<1x256xf32>
    %c0_40 = arith.constant 0 : index
    %c12 = arith.constant 12 : index
    %c0_41 = arith.constant 0 : index
    %84 = vector.load %arg2[%c0_40, %c12, %c0_41] : memref<1x24x256xf32, #tpu.memory_space<vmem>>, vector<1x3x256xf32>
    %85 = vector.shape_cast %84 : vector<1x3x256xf32> to vector<3x256xf32>
    %86 = vector.broadcast %83 : vector<1x256xf32> to vector<3x256xf32>
    %87 = arith.mulf %86, %85 : vector<3x256xf32>
    %88 = arith.addf %70, %87 : vector<3x256xf32>
    %cst_42 = arith.constant 1.000000e+00 : f32
    %89 = vector.broadcast %cst_42 : f32 to vector<1x256xf32>
    %90 = arith.subf %89, %82 : vector<1x256xf32>
    %91 = arith.mulf %73, %90 : vector<1x256xf32>
    %c0_43 = arith.constant 0 : index
    %c5 = arith.constant 5 : index
    %c0_44 = arith.constant 0 : index
    %92 = vector.load %arg3[%c0_43, %c5, %c0_44] : memref<1x8x256xf32, #tpu.memory_space<vmem>>, vector<1x1x256xf32>
    %93 = vector.shape_cast %92 : vector<1x1x256xf32> to vector<1x256xf32>
    %cst_45 = arith.constant 0.000000e+00 : f32
    %94 = vector.broadcast %cst_45 : f32 to vector<1x256xf32>
    %95 = arith.maximumf %93, %94 : vector<1x256xf32>
    %cst_46 = arith.constant 0.000000e+00 : f32
    %96 = vector.broadcast %cst_46 : f32 to vector<1x256xf32>
    %97 = arith.subf %96, %95 : vector<1x256xf32>
    %cst_47 = arith.constant 1.000000e+04 : f32
    %98 = vector.broadcast %cst_47 : f32 to vector<1x256xf32>
    %99 = arith.mulf %97, %98 : vector<1x256xf32>
    %100 = math.exp %99 : vector<1x256xf32>
    %101 = arith.mulf %91, %100 : vector<1x256xf32>
    %c0_48 = arith.constant 0 : index
    %c15 = arith.constant 15 : index
    %c0_49 = arith.constant 0 : index
    %102 = vector.load %arg2[%c0_48, %c15, %c0_49] : memref<1x24x256xf32, #tpu.memory_space<vmem>>, vector<1x3x256xf32>
    %103 = vector.shape_cast %102 : vector<1x3x256xf32> to vector<3x256xf32>
    %104 = vector.broadcast %101 : vector<1x256xf32> to vector<3x256xf32>
    %105 = arith.mulf %104, %103 : vector<3x256xf32>
    %106 = arith.addf %88, %105 : vector<3x256xf32>
    %cst_50 = arith.constant 1.000000e+00 : f32
    %107 = vector.broadcast %cst_50 : f32 to vector<1x256xf32>
    %108 = arith.subf %107, %100 : vector<1x256xf32>
    %109 = arith.mulf %91, %108 : vector<1x256xf32>
    %c0_51 = arith.constant 0 : index
    %c6_52 = arith.constant 6 : index
    %c0_53 = arith.constant 0 : index
    %110 = vector.load %arg3[%c0_51, %c6_52, %c0_53] : memref<1x8x256xf32, #tpu.memory_space<vmem>>, vector<1x1x256xf32>
    %111 = vector.shape_cast %110 : vector<1x1x256xf32> to vector<1x256xf32>
    %cst_54 = arith.constant 0.000000e+00 : f32
    %112 = vector.broadcast %cst_54 : f32 to vector<1x256xf32>
    %113 = arith.maximumf %111, %112 : vector<1x256xf32>
    %cst_55 = arith.constant 0.000000e+00 : f32
    %114 = vector.broadcast %cst_55 : f32 to vector<1x256xf32>
    %115 = arith.subf %114, %113 : vector<1x256xf32>
    %cst_56 = arith.constant 1.000000e+04 : f32
    %116 = vector.broadcast %cst_56 : f32 to vector<1x256xf32>
    %117 = arith.mulf %115, %116 : vector<1x256xf32>
    %118 = math.exp %117 : vector<1x256xf32>
    %119 = arith.mulf %109, %118 : vector<1x256xf32>
    %c0_57 = arith.constant 0 : index
    %c18 = arith.constant 18 : index
    %c0_58 = arith.constant 0 : index
    %120 = vector.load %arg2[%c0_57, %c18, %c0_58] : memref<1x24x256xf32, #tpu.memory_space<vmem>>, vector<1x3x256xf32>
    %121 = vector.shape_cast %120 : vector<1x3x256xf32> to vector<3x256xf32>
    %122 = vector.broadcast %119 : vector<1x256xf32> to vector<3x256xf32>
    %123 = arith.mulf %122, %121 : vector<3x256xf32>
    %124 = arith.addf %106, %123 : vector<3x256xf32>
    %cst_59 = arith.constant 1.000000e+00 : f32
    %125 = vector.broadcast %cst_59 : f32 to vector<1x256xf32>
    %126 = arith.subf %125, %118 : vector<1x256xf32>
    %127 = arith.mulf %109, %126 : vector<1x256xf32>
    %c0_60 = arith.constant 0 : index
    %c7 = arith.constant 7 : index
    %c0_61 = arith.constant 0 : index
    %128 = vector.load %arg3[%c0_60, %c7, %c0_61] : memref<1x8x256xf32, #tpu.memory_space<vmem>>, vector<1x1x256xf32>
    %129 = vector.shape_cast %128 : vector<1x1x256xf32> to vector<1x256xf32>
    %cst_62 = arith.constant 0.000000e+00 : f32
    %130 = vector.broadcast %cst_62 : f32 to vector<1x256xf32>
    %131 = arith.maximumf %129, %130 : vector<1x256xf32>
    %cst_63 = arith.constant 0.000000e+00 : f32
    %132 = vector.broadcast %cst_63 : f32 to vector<1x256xf32>
    %133 = arith.subf %132, %131 : vector<1x256xf32>
    %cst_64 = arith.constant 1.000000e+04 : f32
    %134 = vector.broadcast %cst_64 : f32 to vector<1x256xf32>
    %135 = arith.mulf %133, %134 : vector<1x256xf32>
    %136 = math.exp %135 : vector<1x256xf32>
    %137 = arith.mulf %127, %136 : vector<1x256xf32>
    %c0_65 = arith.constant 0 : index
    %c21 = arith.constant 21 : index
    %c0_66 = arith.constant 0 : index
    %138 = vector.load %arg2[%c0_65, %c21, %c0_66] : memref<1x24x256xf32, #tpu.memory_space<vmem>>, vector<1x3x256xf32>
    %139 = vector.shape_cast %138 : vector<1x3x256xf32> to vector<3x256xf32>
    %140 = vector.broadcast %137 : vector<1x256xf32> to vector<3x256xf32>
    %141 = arith.mulf %140, %139 : vector<3x256xf32>
    %142 = arith.addf %124, %141 : vector<3x256xf32>
    %cst_67 = arith.constant 1.000000e+00 : f32
    %143 = vector.broadcast %cst_67 : f32 to vector<1x256xf32>
    %144 = arith.subf %143, %136 : vector<1x256xf32>
    %145 = arith.mulf %127, %144 : vector<1x256xf32>
    %146 = vector.extract_strided_slice %142 {offsets = [0, 0], sizes = [1, 256], strides = [1, 1]} : vector<3x256xf32> to vector<1x256xf32>
    %cst_68 = arith.constant 1.000000e+00 : f32
    %147 = vector.broadcast %cst_68 : f32 to vector<1x256xf32>
    %148 = arith.mulf %145, %147 : vector<1x256xf32>
    %149 = arith.addf %146, %148 : vector<1x256xf32>
    %150 = vector.extract_strided_slice %142 {offsets = [1, 0], sizes = [1, 256], strides = [1, 1]} : vector<3x256xf32> to vector<1x256xf32>
    %cst_69 = arith.constant 1.000000e+00 : f32
    %151 = vector.broadcast %cst_69 : f32 to vector<1x256xf32>
    %152 = arith.mulf %145, %151 : vector<1x256xf32>
    %153 = arith.addf %150, %152 : vector<1x256xf32>
    %154 = vector.extract_strided_slice %142 {offsets = [2, 0], sizes = [1, 256], strides = [1, 1]} : vector<3x256xf32> to vector<1x256xf32>
    %cst_70 = arith.constant 1.000000e+00 : f32
    %155 = vector.broadcast %cst_70 : f32 to vector<1x256xf32>
    %156 = arith.mulf %145, %155 : vector<1x256xf32>
    %157 = arith.addf %154, %156 : vector<1x256xf32>
    %cst_71 = arith.constant 1.000000e+00 : f32
    %158 = vector.broadcast %cst_71 : f32 to vector<1x256xf32>
    %159 = arith.subf %158, %145 : vector<1x256xf32>
    %160 = tpu.concatenate %149, %153, %157, %159 in 0 : vector<1x256xf32>, vector<1x256xf32>, vector<1x256xf32>, vector<1x256xf32> -> vector<4x256xf32>
    %c0_72 = arith.constant 0 : index
    %c0_73 = arith.constant 0 : index
    %c0_74 = arith.constant 0 : index
    %161 = vector.load %arg4[%c0_72, %c0_73, %c0_74] : memref<1x4x256xf32, #tpu.memory_space<vmem>>, vector<1x4x256xf32>
    %162 = vector.shape_cast %161 : vector<1x4x256xf32> to vector<4x256xf32>
    %163 = vector.shape_cast %160 : vector<4x256xf32> to vector<1x4x256xf32>
    tpu.vector_store %arg4[%c0_72, %c0_73, %c0_74], %163 {strides = array<i32>} : memref<1x4x256xf32, #tpu.memory_space<vmem>>, vector<1x4x256xf32>,
    return
  }
  func.func @transform_0(%arg0: i32, %arg1: i32) -> (i32, i32, i32) {
    %c0_i32 = arith.constant 0 : i32
    %c0_i32_0 = arith.constant 0 : i32
    return %arg0, %c0_i32, %arg1 : i32, i32, i32
  }
  func.func @transform_1(%arg0: i32, %arg1: i32) -> (i32, i32, i32) {
    %c0_i32 = arith.constant 0 : i32
    %c0_i32_0 = arith.constant 0 : i32
    return %arg0, %c0_i32, %arg1 : i32, i32, i32
  }
  func.func @transform_2(%arg0: i32, %arg1: i32) -> (i32, i32, i32) {
    %c0_i32 = arith.constant 0 : i32
    %c0_i32_0 = arith.constant 0 : i32
    return %arg0, %c0_i32, %arg1 : i32, i32, i32
  }
}

</mosaic_0001>

<llo_original>
// kernel: tpu_custom_call.1
$region0: #{tpu_custom_call.1}
  #allocation0 [shape = 'u32[]', space=smem, size = 0x4, offset = 0x4, fixed_abs, tag = 'smem constant byte address 0x4 - core index']
  #allocation1 [shape = 'u32[144,128]{1,0:T(1,128)}', space=vmem, size = 0x12000, scoped, tag = 'internal scratch']
  %s0 = inlined_call_operand.hbm [shape: f32[2,24,256], index: 0, kind: input, shape index: {}]
  %s1 = inlined_call_operand.hbm [shape: f32[2,8,256], index: 1, kind: input, shape index: {}]
  %s2 = inlined_call_operand.hbm [shape: f32[2,4,256], index: 2, kind: output, shape index: {}]
  %s3 = sld [smem:[#allocation0]]
  $region49: #{tpu_custom_call.1} parent=0
    _
  %s5 = ssub.s32 1, %s3
  %s6 = scalar_select 0, %s5, %s3
  $region1: #{tpu_custom_call.1} parent=0
    #allocation2 [shape = 'u8[49152]{0}', space=vmem, size = 0xc000, scoped, tag = 'input window, operand 0']
    #allocation3 [shape = 's32[2]{0}', space=sflag, size = 0x8, scoped, tag = 'scoped memory for tpu_custom_call.1']
    #allocation4 [shape = 's32[2]{0}', space=sflag, size = 0x8, scoped, tag = 'scoped memory for tpu_custom_call.1']
    #allocation5 [shape = 'u8[16384]{0}', space=vmem, size = 0x4000, scoped, tag = 'input window, operand 1']
    #allocation6 [shape = 's32[2]{0}', space=sflag, size = 0x8, scoped, tag = 'scoped memory for tpu_custom_call.1']
    #allocation7 [shape = 'u8[8192]{0}', space=vmem, size = 0x2000, scoped, tag = 'output window, operand 0']
    %7 = vsyncpa [#allocation3], 0
    %s8 = scalar_lea.sflag [#allocation3], 1
    %9 = vsyncpa %s8, 0
    %10 = vsyncpa [#allocation6], 0
    %s11 = scalar_lea.sflag [#allocation6], 1
    %12 = vsyncpa %s11, 0
    %13 = vsyncpa [#allocation4], 0
    %s14 = scalar_lea.sflag [#allocation4], 1
    %15 = vsyncpa %s14, 0
    loop: start=0, step=1, limit=4
    $region2: #{tpu_custom_call.1} parent=1 // loop_pre_header
      _
    $region3: #{tpu_custom_call.1} parent=1 // loop_header
      %s17 = sphi 0, %s21
      %p18 = scmp.ge.s32.totalorder %s17, 4
      %s24 = sphi 0, %s36
      %s25 = sphi 0, %s32
      %s26 = sphi 0, %s24
      %s27 = sphi 0, %s25
      %s28 = sphi 0, %s26
      %s29 = sphi 0, %s27
      %s41 = sphi 0, %s43
      %s44 = sphi 0, %s41
      %s45 = sphi 0, %s44
      %s61 = sphi 0, %s45
      %s69 = sphi 0, %s71
      %s72 = sphi 0, %s69
      %s73 = sphi 0, %s72
      %s89 = sphi 0, %s73
      %s97 = sphi 0, %s99
      %s100 = sphi 0, %s97
      %s101 = sphi 0, %s100
      %s117 = sphi 0, %s101
    $region4: #{tpu_custom_call.1} parent=1 // loop_header_branch
      %20 = sbr.rel (%p18) target = $region8
    $region5: #{tpu_custom_call.1} parent=1 // loop_body
      %s22 = ssub.s32 %s17, 1
      %s23 = ssub.s32 %s17, 2
      %s30 = sadd.s32 1, %s25
      %p31 = scmp.ge.s32.totalorder %s30, 1
      %s32 = scalar_select %p31, 0, %s30
      %s33 = sadd.s32 1, %s24
      %s34 = scalar_select %p31, %s33, %s24
      %p35 = scmp.ge.s32.totalorder %s34, 2
      %s36 = scalar_select %p35, 0, %s34
      %s37 = ssub.s32 %s24, %s36
      %s38 = ssub.s32 %s25, %s32
      %s39 = sor.u32 %s37, %s38
      %p40 = scmp.eq.s32.totalorder %s39, 0
      %s42 = sadd.s32 %s41, 1
      %s43 = scalar_select %p40, %s41, %s42
      %p46 = pneg %p40
      %p47 = scmp.eq.s32.totalorder %s17, 1
      %p48 = por %p46, %p47
      %p49 = scmp.ne.s32.totalorder %s41, %s44
      %p50 = scmp.eq.s32.totalorder %s17, 0
      %p51 = por %p49, %p50
      %p52 = scmp.ne.s32.totalorder %s41, %s44
      %p53 = scmp.eq.s32.totalorder %s22, 1
      %p54 = por %p52, %p53
      %p55 = scmp.ne.s32.totalorder %s44, %s45
      %p56 = scmp.eq.s32.totalorder %s22, 0
      %p57 = por %p55, %p56
      %p58 = scmp.ne.s32.totalorder %s44, %s45
      %p59 = scmp.eq.s32.totalorder %s23, 1
      %p60 = por %p58, %p59
      %p62 = scmp.ne.s32.totalorder %s45, %s61
      %p63 = scmp.eq.s32.totalorder %s23, 0
      %p64 = por %p62, %p63
      %s65 = ssub.s32 %s24, %s36
      %s66 = ssub.s32 %s25, %s32
      %s67 = sor.u32 %s65, %s66
      %p68 = scmp.eq.s32.totalorder %s67, 0
      %s70 = sadd.s32 %s69, 1
      %s71 = scalar_select %p68, %s69, %s70
      %p74 = pneg %p68
      %p75 = scmp.eq.s32.totalorder %s17, 1
      %p76 = por %p74, %p75
      %p77 = scmp.ne.s32.totalorder %s69, %s72
      %p78 = scmp.eq.s32.totalorder %s17, 0
      %p79 = por %p77, %p78
      %p80 = scmp.ne.s32.totalorder %s69, %s72
      %p81 = scmp.eq.s32.totalorder %s22, 1
      %p82 = por %p80, %p81
      %p83 = scmp.ne.s32.totalorder %s72, %s73
      %p84 = scmp.eq.s32.totalorder %s22, 0
      %p85 = por %p83, %p84
      %p86 = scmp.ne.s32.totalorder %s72, %s73
      %p87 = scmp.eq.s32.totalorder %s23, 1
      %p88 = por %p86, %p87
      %p90 = scmp.ne.s32.totalorder %s73, %s89
      %p91 = scmp.eq.s32.totalorder %s23, 0
      %p92 = por %p90, %p91
      %s93 = ssub.s32 %s24, %s36
      %s94 = ssub.s32 %s25, %s32
      %s95 = sor.u32 %s93, %s94
      %p96 = scmp.eq.s32.totalorder %s95, 0
      %s98 = sadd.s32 %s97, 1
      %s99 = scalar_select %p96, %s97, %s98
      %p102 = pneg %p96
      %p103 = scmp.eq.s32.totalorder %s17, 1
      %p104 = por %p102, %p103
      %p105 = scmp.ne.s32.totalorder %s97, %s100
      %p106 = scmp.eq.s32.totalorder %s17, 0
      %p107 = por %p105, %p106
      %p108 = scmp.ne.s32.totalorder %s97, %s100
      %p109 = scmp.eq.s32.totalorder %s22, 1
      %p110 = por %p108, %p109
      %p111 = scmp.ne.s32.totalorder %s100, %s101
      %p112 = scmp.eq.s32.totalorder %s22, 0
      %p113 = por %p111, %p112
      %p114 = scmp.ne.s32.totalorder %s100, %s101
      %p115 = scmp.eq.s32.totalorder %s23, 1
      %p116 = por %p114, %p115
      %p118 = scmp.ne.s32.totalorder %s101, %s117
      %p119 = scmp.eq.s32.totalorder %s23, 0
      %p120 = por %p118, %p119
      %p121 = scmp.le.s32.totalorder 1, %s17
      %p122 = scmp.lt.s32.totalorder %s17, 3
      %p123 = pnand %p121, %p122
      %p124 = pneg %p123
      // Predicated region
      $region9: #{tpu_custom_call.1} parent=5 // pred_check
        _
      $region10: #{tpu_custom_call.1} parent=5 // pred_check_branch
        %126 = sbr.rel (%p123) target = $region12
      $region11: #{tpu_custom_call.1} parent=5 // pred_region
        %s127 = ssub.s32 %s17, 1
      $region12: #{tpu_custom_call.1} parent=5 // pred_fallthru
        _
      %p128 = scmp.lt.s32.totalorder %s17, 2
      // Predicated region
      $region13: #{tpu_custom_call.1} parent=5 // pred_check
        %p129 = pneg %p128
      $region14: #{tpu_custom_call.1} parent=5 // pred_check_branch
        %131 = sbr.rel (%p129) target = $region16
      $region15: #{tpu_custom_call.1} parent=5 // pred_region
        // Predicated region
        $region17: #{tpu_custom_call.1} parent=15 // pred_check
          %p132 = pneg %p51
        $region18: #{tpu_custom_call.1} parent=15 // pred_check_branch
          %134 = sbr.rel (%p132) target = $region20
        $region19: #{tpu_custom_call.1} parent=15 // pred_region
          %s135 = sand.u32 %s41, 1
          %s136 = scalar_lea.sflag [#allocation3], %s135
          %s137 = sand.u32 %s41, 1
          %s138 = smul.addr %s137, 48
          %s139 = scalar_lea.vmem [#allocation2], %s138
          %s140 = smul.u32 2, %s25
          %s142 = ssub.s32 768, 768
          %143 = vsyncadd %s136, %s142
          %s144 = smul.addr %s24, 6
          %s145 = sadd.s32 %s140, %s144
          %s146 = smul.addr %s145, 128
          %s147 = scalar_lea.hbm %s0, %s146
          %s148 = sshll.u32 %s139, 4
          %s149 = int_to_ptr.vmem [resolvable:$true] %s148
          %154 = dma.hbm_to_vmem [thread:$0]  %s147, 768, %s149, %s136, 256, 256, 16
        $region20: #{tpu_custom_call.1} parent=15 // pred_fallthru
          _
        // Predicated region
        $region21: #{tpu_custom_call.1} parent=15 // pred_check
          %p155 = pneg %p79
        $region22: #{tpu_custom_call.1} parent=15 // pred_check_branch
          %157 = sbr.rel (%p155) target = $region24
        $region23: #{tpu_custom_call.1} parent=15 // pred_region
          %s158 = sand.u32 %s69, 1
          %s159 = scalar_lea.sflag [#allocation6], %s158
          %s160 = sand.u32 %s69, 1
          %s161 = smul.addr %s160, 16
          %s162 = scalar_lea.vmem [#allocation5], %s161
          %s163 = smul.u32 2, %s25
          %s165 = ssub.s32 256, 256
          %166 = vsyncadd %s159, %s165
          %s167 = smul.addr %s24, 2
          %s168 = sadd.s32 %s163, %s167
          %s169 = smul.addr %s168, 128
          %s170 = scalar_lea.hbm %s1, %s169
          %s172 = sshll.u32 %s162, 4
          %s173 = int_to_ptr.vmem [resolvable:$true] %s172
          %175 = dma.hbm_to_vmem [thread:$0]  %s170, 256, %s173, %s159
        $region24: #{tpu_custom_call.1} parent=15 // pred_fallthru
          _
      $region16: #{tpu_custom_call.1} parent=5 // pred_fallthru
        _
      %p176 = scmp.le.s32.totalorder 1, %s17
      %p177 = scmp.lt.s32.totalorder %s17, 3
      %p178 = pnand %p176, %p177
      %p179 = pneg %p178
      // Predicated region
      $region25: #{tpu_custom_call.1} parent=5 // pred_check
        _
      $region26: #{tpu_custom_call.1} parent=5 // pred_check_branch
        %181 = sbr.rel (%p178) target = $region28
      $region27: #{tpu_custom_call.1} parent=5 // pred_region
        %s182 = ssub.s32 %s17, 1
        %s183 = sand.u32 %s44, 1
        %s184 = scalar_lea.sflag [#allocation3], %s183
        %s185 = sand.u32 %s44, 1
        %s186 = smul.addr %s185, 48
        %s187 = scalar_lea.vmem [#allocation2], %s186
        // Predicated region
        $region29: #{tpu_custom_call.1} parent=27 // pred_check
          %p188 = pneg %p57
        $region30: #{tpu_custom_call.1} parent=27 // pred_check_branch
          %190 = sbr.rel (%p188) target = $region32
        $region31: #{tpu_custom_call.1} parent=27 // pred_region
          %191 = dma.done %s184, 768
        $region32: #{tpu_custom_call.1} parent=27 // pred_fallthru
          _
        %s192 = sand.u32 %s72, 1
        %s193 = scalar_lea.sflag [#allocation6], %s192
        %s194 = sand.u32 %s72, 1
        %s195 = smul.addr %s194, 16
        %s196 = scalar_lea.vmem [#allocation5], %s195
        // Predicated region
        $region33: #{tpu_custom_call.1} parent=27 // pred_check
          %p197 = pneg %p85
        $region34: #{tpu_custom_call.1} parent=27 // pred_check_branch
          %199 = sbr.rel (%p197) target = $region36
        $region35: #{tpu_custom_call.1} parent=27 // pred_region
          %200 = dma.done %s193, 256
        $region36: #{tpu_custom_call.1} parent=27 // pred_fallthru
          _
        %s201 = sand.u32 %s44, 1
        %s202 = scalar_lea.sflag [#allocation3], %s201
        %s203 = sand.u32 %s44, 1
        %s204 = smul.addr %s203, 48
        %s205 = scalar_lea.vmem [#allocation2], %s204
        %p206 = pneg %p57
        %p207 = pneg %p54
        %s208 = sand.u32 %s72, 1
        %s209 = scalar_lea.sflag [#allocation6], %s208
        %s210 = sand.u32 %s72, 1
        %s211 = smul.addr %s210, 16
        %s212 = scalar_lea.vmem [#allocation5], %s211
        %p213 = pneg %p85
        %p214 = pneg %p82
        %p215 = pneg %p113
        %p216 = pneg %p110
        %s217 = sand.u32 %s100, 1
        %s218 = scalar_lea.sflag [#allocation4], %s217
        %s219 = sand.u32 %s100, 1
        %s220 = smul.addr %s219, 8
        %s221 = scalar_lea.vmem [#allocation7], %s220
        %s222 = smul.u32 2, %s27
        %s223 = smul.u32 2, %s27
        %s224 = smul.u32 2, %s27
        %v225 = vld [vmem:[%s196] ss:$8 sm:$0x3]
        %v226 = vmax.f32 %v225, 0.0
        %v227 = vsub.f32 0.0, %v226
        %v228 = vmul.f32 %v227, 10000.0
        %v229 = vmul.f32 %v228, 1.442695
        %v230 = vpow.pop %v229
        %v231 = vld [vmem:[%s187] sm:$0x7]
        %v232 = vld [vmem:[%s187 + $0x8] sm:$0x7]
        %v234 = vlaneseq
        %v235 = vshrl.u32 %v234, 7
        %v236 = vsub.s32 0, %v235
        %v237 = vrot.slane %v230, %v236
        %v238 = vlaneseq
        %v239 = vshrl.u32 %v238, 7
        %v240 = vsub.s32 1, %v239
        %v241 = vrot.slane %v230, %v240
        %v244 = vmul.f32 %v237, %v231
        %v245 = vmul.f32 %v241, %v232
        %v246 = vadd.f32 %v244, 0.0
        %v247 = vadd.f32 %v245, 0.0
        %v248 = vsub.f32 1.0, %v230
        %s249 = scalar_lea.vmem %s196, 1 [#allocation5]
        %v250 = vld [vmem:[%s249] ss:$8 sm:$0x3]
        %v251 = vmax.f32 %v250, 0.0
        %v252 = vsub.f32 0.0, %v251
        %v253 = vmul.f32 %v252, 10000.0
        %v254 = vmul.f32 %v253, 1.442695
        %v255 = vpow.pop %v254
        %v256 = vmul.f32 %v248, %v255
        %v257 = vld [vmem:[%s187] sm:$0x38]
        %v258 = vld [vmem:[%s187 + $0x8] sm:$0x38]
        %v260 = vlaneseq
        %v261 = vshrl.u32 %v260, 7
        %v262 = vsub.s32 0, %v261
        %v263 = vrot.slane %v256, %v262
        %v264 = vlaneseq
        %v265 = vshrl.u32 %v264, 7
        %v266 = vsub.s32 1, %v265
        %v267 = vrot.slane %v256, %v266
        %v270 = vmul.f32 %v263, %v257
        %v271 = vmul.f32 %v267, %v258
        %v274 = vrot.slane %v270, 3
        %v275 = vrot.slane %v271, 3
        %v278 = vadd.f32 %v246, %v274
        %v279 = vadd.f32 %v247, %v275
        %v280 = vsub.f32 1.0, %v255
        %v281 = vmul.f32 %v248, %v280
        %s282 = scalar_lea.vmem %s196, 2 [#allocation5]
        %v283 = vld [vmem:[%s282] ss:$8 sm:$0x3]
        %v284 = vmax.f32 %v283, 0.0
        %v285 = vsub.f32 0.0, %v284
        %v286 = vmul.f32 %v285, 10000.0
        %v287 = vmul.f32 %v286, 1.442695
        %v288 = vpow.pop %v287
        %v289 = vmul.f32 %v281, %v288
        %v290 = vld [vmem:[%s187] sm:$0xc0]
        %v291 = vld [vmem:[%s187 + $0x8] sm:$0xc0]
        %v292 = vld [vmem:[%s187 + $0x10] sm:$0x1]
        %v293 = vld [vmem:[%s187 + $0x18] sm:$0x1]
        %v295 = vlaneseq
        %v296 = vshrl.u32 %v295, 7
        %v297 = vsub.s32 0, %v296
        %v298 = vrot.slane %v289, %v297
        %v299 = vlaneseq
        %v300 = vshrl.u32 %v299, 7
        %v301 = vsub.s32 1, %v300
        %v302 = vrot.slane %v289, %v301
        %v305 = vmul.f32 %v298, %v290
        %v306 = vmul.f32 %v302, %v291
        %v307 = vmul.f32 %v298, %v292
        %v308 = vmul.f32 %v302, %v293
        %vm313 = vcmask 1041408
        %v314 = vrot.slane %v305, 6
        %v315 = vrot.slane %v307, 6
        %v316 = vsel %vm313, %v314, %v315
        %v317 = vrot.slane %v306, 6
        %v318 = vrot.slane %v308, 6
        %v319 = vsel %vm313, %v317, %v318
        %v322 = vadd.f32 %v278, %v316
        %v323 = vadd.f32 %v279, %v319
        %v324 = vsub.f32 1.0, %v288
        %v325 = vmul.f32 %v281, %v324
        %s326 = scalar_lea.vmem %s196, 3 [#allocation5]
        %v327 = vld [vmem:[%s326] ss:$8 sm:$0x3]
        %v328 = vmax.f32 %v327, 0.0
        %v329 = vsub.f32 0.0, %v328
        %v330 = vmul.f32 %v329, 10000.0
        %v331 = vmul.f32 %v330, 1.442695
        %v332 = vpow.pop %v331
        %v333 = vmul.f32 %v325, %v332
        %v334 = vld [vmem:[%s187 + $0x10] sm:$0xe]
        %v335 = vld [vmem:[%s187 + $0x18] sm:$0xe]
        %v337 = vlaneseq
        %v338 = vshrl.u32 %v337, 7
        %v339 = vsub.s32 0, %v338
        %v340 = vrot.slane %v333, %v339
        %v341 = vlaneseq
        %v342 = vshrl.u32 %v341, 7
        %v343 = vsub.s32 1, %v342
        %v344 = vrot.slane %v333, %v343
        %v347 = vmul.f32 %v340, %v334
        %v348 = vmul.f32 %v344, %v335
        %v351 = vrot.slane %v347, 1
        %v352 = vrot.slane %v348, 1
        %v355 = vadd.f32 %v322, %v351
        %v356 = vadd.f32 %v323, %v352
        %v357 = vsub.f32 1.0, %v332
        %v358 = vmul.f32 %v325, %v357
        %s359 = scalar_lea.vmem %s196, 4 [#allocation5]
        %v360 = vld [vmem:[%s359] ss:$8 sm:$0x3]
        %v361 = vmax.f32 %v360, 0.0
        %v362 = vsub.f32 0.0, %v361
        %v363 = vmul.f32 %v362, 10000.0
        %v364 = vmul.f32 %v363, 1.442695
        %v365 = vpow.pop %v364
        %v366 = vmul.f32 %v358, %v365
        %v367 = vld [vmem:[%s187 + $0x10] sm:$0x70]
        %v368 = vld [vmem:[%s187 + $0x18] sm:$0x70]
        %v370 = vlaneseq
        %v371 = vshrl.u32 %v370, 7
        %v372 = vsub.s32 0, %v371
        %v373 = vrot.slane %v366, %v372
        %v374 = vlaneseq
        %v375 = vshrl.u32 %v374, 7
        %v376 = vsub.s32 1, %v375
        %v377 = vrot.slane %v366, %v376
        %v380 = vmul.f32 %v373, %v367
        %v381 = vmul.f32 %v377, %v368
        %v384 = vrot.slane %v380, 4
        %v385 = vrot.slane %v381, 4
        %v388 = vadd.f32 %v355, %v384
        %v389 = vadd.f32 %v356, %v385
        %v390 = vsub.f32 1.0, %v365
        %v391 = vmul.f32 %v358, %v390
        %s392 = scalar_lea.vmem %s196, 5 [#allocation5]
        %v393 = vld [vmem:[%s392] ss:$8 sm:$0x3]
        %v394 = vmax.f32 %v393, 0.0
        %v395 = vsub.f32 0.0, %v394
        %v396 = vmul.f32 %v395, 10000.0
        %v397 = vmul.f32 %v396, 1.442695
        %v398 = vpow.pop %v397
        %v399 = vmul.f32 %v391, %v398
        %v400 = vld [vmem:[%s187 + $0x10] sm:$0x80]
        %v401 = vld [vmem:[%s187 + $0x18] sm:$0x80]
        %v402 = vld [vmem:[%s187 + $0x20] sm:$0x3]
        %v403 = vld [vmem:[%s187 + $0x28] sm:$0x3]
        %v405 = vlaneseq
        %v406 = vshrl.u32 %v405, 7
        %v407 = vsub.s32 0, %v406
        %v408 = vrot.slane %v399, %v407
        %v409 = vlaneseq
        %v410 = vshrl.u32 %v409, 7
        %v411 = vsub.s32 1, %v410
        %v412 = vrot.slane %v399, %v411
        %v415 = vmul.f32 %v408, %v400
        %v416 = vmul.f32 %v412, %v401
        %v417 = vmul.f32 %v408, %v402
        %v418 = vmul.f32 %v412, %v403
        %vm423 = vcmask 1040384
        %v424 = vrot.slane %v415, 7
        %v425 = vrot.slane %v417, 7
        %v426 = vsel %vm423, %v424, %v425
        %v427 = vrot.slane %v416, 7
        %v428 = vrot.slane %v418, 7
        %v429 = vsel %vm423, %v427, %v428
        %v432 = vadd.f32 %v388, %v426
        %v433 = vadd.f32 %v389, %v429
        %v434 = vsub.f32 1.0, %v398
        %v435 = vmul.f32 %v391, %v434
        %s436 = scalar_lea.vmem %s196, 6 [#allocation5]
        %v437 = vld [vmem:[%s436] ss:$8 sm:$0x3]
        %v438 = vmax.f32 %v437, 0.0
        %v439 = vsub.f32 0.0, %v438
        %v440 = vmul.f32 %v439, 10000.0
        %v441 = vmul.f32 %v440, 1.442695
        %v442 = vpow.pop %v441
        %v443 = vmul.f32 %v435, %v442
        %v444 = vld [vmem:[%s187 + $0x20] sm:$0x1c]
        %v445 = vld [vmem:[%s187 + $0x28] sm:$0x1c]
        %v447 = vlaneseq
        %v448 = vshrl.u32 %v447, 7
        %v449 = vsub.s32 0, %v448
        %v450 = vrot.slane %v443, %v449
        %v451 = vlaneseq
        %v452 = vshrl.u32 %v451, 7
        %v453 = vsub.s32 1, %v452
        %v454 = vrot.slane %v443, %v453
        %v457 = vmul.f32 %v450, %v444
        %v458 = vmul.f32 %v454, %v445
        %v461 = vrot.slane %v457, 2
        %v462 = vrot.slane %v458, 2
        %v465 = vadd.f32 %v432, %v461
        %v466 = vadd.f32 %v433, %v462
        %v467 = vsub.f32 1.0, %v442
        %v468 = vmul.f32 %v435, %v467
        %s469 = scalar_lea.vmem %s196, 7 [#allocation5]
        %v470 = vld [vmem:[%s469] ss:$8 sm:$0x3]
        %v471 = vmax.f32 %v470, 0.0
        %v472 = vsub.f32 0.0, %v471
        %v473 = vmul.f32 %v472, 10000.0
        %v474 = vmul.f32 %v473, 1.442695
        %v475 = vpow.pop %v474
        %v476 = vmul.f32 %v468, %v475
        %v477 = vld [vmem:[%s187 + $0x20] sm:$0xe0]
        %v478 = vld [vmem:[%s187 + $0x28] sm:$0xe0]
        %v480 = vlaneseq
        %v481 = vshrl.u32 %v480, 7
        %v482 = vsub.s32 0, %v481
        %v483 = vrot.slane %v476, %v482
        %v484 = vlaneseq
        %v485 = vshrl.u32 %v484, 7
        %v486 = vsub.s32 1, %v485
        %v487 = vrot.slane %v476, %v486
        %v490 = vmul.f32 %v483, %v477
        %v491 = vmul.f32 %v487, %v478
        %v494 = vrot.slane %v490, 5
        %v495 = vrot.slane %v491, 5
        %v498 = vadd.f32 %v465, %v494
        %v499 = vadd.f32 %v466, %v495
        %v500 = vsub.f32 1.0, %v475
        %v501 = vmul.f32 %v468, %v500
        %v503 = vlaneseq
        %v504 = vshrl.u32 %v503, 7
        %v505 = vsub.s32 0, %v504
        %v506 = vrot.slane %v501, %v505
        %v507 = vlaneseq
        %v508 = vshrl.u32 %v507, 7
        %v509 = vsub.s32 1, %v508
        %v510 = vrot.slane %v501, %v509
        %v513 = vadd.f32 %v498, %v506
        %v514 = vadd.f32 %v499, %v510
        %v515 = vsub.f32 1.0, %v501
        %v517 = vlaneseq
        %v518 = vshrl.u32 %v517, 7
        %v519 = vsub.s32 0, %v518
        %v520 = vrot.slane %v515, %v519
        %v521 = vlaneseq
        %v522 = vshrl.u32 %v521, 7
        %v523 = vsub.s32 1, %v522
        %v524 = vrot.slane %v515, %v523
        %v527 = vsel %vm313, %v513, %v513
        %v528 = vsel %vm313, %v514, %v514
        %vm529 = vcmask 1042432
        %v530 = vsel %vm529, %v527, %v520
        %v531 = vsel %vm529, %v528, %v524
        %v534 = vcombine.low %v530, %v531
        %536 = vst [vmem:[%s221] sm:$0xff] %v534
        %s537 = sand.u32 %s100, 1
        %s538 = scalar_lea.sflag [#allocation4], %s537
        %s539 = sand.u32 %s100, 1
        %s540 = smul.addr %s539, 8
        %s541 = scalar_lea.vmem [#allocation7], %s540
        // Predicated region
        $region37: #{tpu_custom_call.1} parent=27 // pred_check
          %p542 = pneg %p110
        $region38: #{tpu_custom_call.1} parent=27 // pred_check_branch
          %544 = sbr.rel (%p542) target = $region40
        $region39: #{tpu_custom_call.1} parent=27 // pred_region
          %s545 = smul.u32 2, %s27
          %s547 = ssub.s32 128, 128
          %548 = vsyncadd %s538, %s547
          %s549 = smul.addr %s26, 2
          %s550 = sadd.s32 %s545, %s549
          %s551 = smul.addr %s550, 64
          %s552 = scalar_lea.hbm %s2, %s551
          %s554 = sshll.u32 %s541, 4
          %s555 = int_to_ptr.vmem [resolvable:$true] %s554
          %557 = dma.vmem_to_hbm [thread:$0]  %s555, 128, %s552, %s538
        $region40: #{tpu_custom_call.1} parent=27 // pred_fallthru
          _
      $region28: #{tpu_custom_call.1} parent=5 // pred_fallthru
        _
      %p558 = scmp.le.s32.totalorder 2, %s17
      // Predicated region
      $region41: #{tpu_custom_call.1} parent=5 // pred_check
        %p559 = pneg %p558
      $region42: #{tpu_custom_call.1} parent=5 // pred_check_branch
        %561 = sbr.rel (%p559) target = $region44
      $region43: #{tpu_custom_call.1} parent=5 // pred_region
        %s562 = ssub.s32 %s17, 2
        // Predicated region
        $region45: #{tpu_custom_call.1} parent=43 // pred_check
          %p563 = pneg %p116
        $region46: #{tpu_custom_call.1} parent=43 // pred_check_branch
          %565 = sbr.rel (%p563) target = $region48
        $region47: #{tpu_custom_call.1} parent=43 // pred_region
          %s566 = sand.u32 %s101, 1
          %s567 = scalar_lea.sflag [#allocation4], %s566
          %s568 = sand.u32 %s101, 1
          %s569 = smul.addr %s568, 8
          %s570 = scalar_lea.vmem [#allocation7], %s569
          %571 = dma.done %s567, 128
        $region48: #{tpu_custom_call.1} parent=43 // pred_fallthru
          _
      $region44: #{tpu_custom_call.1} parent=5 // pred_fallthru
        _
    $region6: #{tpu_custom_call.1} parent=1 // loop_footer
      %s21 = sadd.s32 1, %s17
    $region7: #{tpu_custom_call.1} parent=1 // loop_footer_branch
      %16 = sbr.rel target = $region3
    $region8: #{tpu_custom_call.1} parent=1 // loop_exit
      _
    %572 = vsyncpa [#allocation3], 1
    %s573 = scalar_lea.sflag [#allocation3], 1
    %574 = vsyncpa %s573, 1
    %575 = vsyncpa [#allocation6], 1
    %s576 = scalar_lea.sflag [#allocation6], 1
    %577 = vsyncpa %s576, 1
    %578 = vsyncpa [#allocation4], 1
    %s579 = scalar_lea.sflag [#allocation4], 1
    %580 = vsyncpa %s579, 1

</llo_original>
